<compile_context>
chip_gen: v7x
topology: tpu7x:2x2x1
jax: 0.10.0
libtpu: 0.0.40
codegen_flags: <defaults>
</compile_context>

<pallas_src>
import functools
import math

import jax
import jax.numpy as jnp
from jax.experimental import pallas as pl
from jax.experimental.pallas import tpu as pltpu


def _round_up(x, m):
    return (x + m - 1) // m * m


def _pick_tile_rows(rows_per_image, batch, cap=4096):
    """Largest divisor of rows_per_image that is a multiple of 8 and <= cap,
    preferring choices that leave >= 2 total grid steps (v7x: 2 TensorCores).
    Returns None when no such divisor exists (caller pads instead)."""
    divisors = [d for d in range(8, min(rows_per_image, cap) + 1, 8)
                if rows_per_image % d == 0]
    if not divisors:
        return None
    good = [d for d in divisors if batch * (rows_per_image // d) >= 2]
    return max(good) if good else max(divisors)


# ---------------------------------------------------------------------------
# Pass 1: conv-as-matmul (MXU) + per-tile BN partial statistics
# ---------------------------------------------------------------------------
def _conv_stats_kernel(patches_ref, w_ref, conv_ref, sum_ref, ssq_ref):
    """patches_ref: (TILE_R, KKC) bf16; w_ref: (KKC, Cout) bf16 (resident);
    conv_ref: (TILE_R, Cout) bf16; sum_ref/ssq_ref: (1, 1, Cout) f32."""
    conv = jnp.dot(patches_ref[...], w_ref[...],
                   preferred_element_type=jnp.float32)        # MXU, f32 acc
    conv_ref[...] = conv.astype(conv_ref.dtype)               # bf16, true Cout
    sum_ref[0] = jnp.sum(conv, axis=0, keepdims=True)         # (1, Cout)
    ssq_ref[0] = jnp.sum(conv * conv, axis=0, keepdims=True)  # (1, Cout)


# ---------------------------------------------------------------------------
# Pass 2: folded BatchNorm affine + 3x3/s2/p1 maxpool (-inf padding)
# ---------------------------------------------------------------------------
def _bn_pool_kernel(conv_ref, scale_ref, shift_ref, out_ref, pbuf, rbuf):
    """conv_ref: (1, Ho, Wo, C) bf16; scale/shift: (1, C) f32;
    out_ref: (1, Hq, Wq, C) f32; pbuf: (Ho+2, Wo+2, C) f32 scratch;
    rbuf: (Hq, Wo+2, C) f32 scratch."""
    _, Ho, Wo, C = conv_ref.shape
    _, Hq, Wq, _ = out_ref.shape

    # Folded BN: one FMA sweep over the tile.
    y = conv_ref[0].astype(jnp.float32) * scale_ref[...] + shift_ref[...]

    # -inf spatial border once, then the interior (no concatenated copies).
    pbuf[...] = jnp.full(pbuf.shape, -jnp.inf, dtype=pbuf.dtype)
    pbuf[1:Ho + 1, 1:Wo + 1, :] = y

    # Row pooling: 3-row windows at stride 2 via three strided reads + maxima.
    rbuf[...] = jnp.maximum(
        jnp.maximum(pbuf[pl.ds(0, Hq, stride=2), :, :],
                    pbuf[pl.ds(1, Hq, stride=2), :, :]),
        pbuf[pl.ds(2, Hq, stride=2), :, :])

    # Column pooling: same trick along the sublane (W) axis; single store.
    out_ref[0] = jnp.maximum(
        jnp.maximum(rbuf[:, pl.ds(0, Wq, stride=2), :],
                    rbuf[:, pl.ds(1, Wq, stride=2), :]),
        rbuf[:, pl.ds(2, Wq, stride=2), :])


# ---------------------------------------------------------------------------
# Wrapper: NCHW in / NCHW out, matching the PyTorch module.
# ---------------------------------------------------------------------------
@functools.partial(jax.jit, static_argnames=("stride", "eps"))
def image2tokens_forward(x_nchw, w_oihw, gamma, beta, *, stride=2, eps=1e-5):
    N, Cin, H, W = x_nchw.shape
    Cout, _, K, _ = w_oihw.shape
    pad = K // 2
    Ho = (H + 2 * pad - K) // stride + 1
    Wo = (W + 2 * pad - K) // stride + 1
    Hq = (Ho + 2 - 3) // 2 + 1
    Wq = (Wo + 2 - 3) // 2 + 1
    KKC = K * K * Cin
    R = N * Ho * Wo

    # ---- glue (layout only): NCHW -> NHWC bf16, zero-pad, im2col -----------
    x = jnp.transpose(x_nchw, (0, 2, 3, 1)).astype(jnp.bfloat16)
    xp = jnp.pad(x, ((0, 0), (pad, pad), (pad, pad), (0, 0)))
    taps = []
    for ky in range(K):
        for kx in range(K):
            taps.append(
                xp[:, ky:ky + stride * Ho:stride, kx:kx + stride * Wo:stride, :])
    patches = jnp.stack(taps, axis=3).reshape(R, KKC)         # (R, 196) bf16

    # (Cout, Cin, Kh, Kw) -> (ky, kx, cin)-major rows, bf16, true width.
    w2d = jnp.transpose(w_oihw, (2, 3, 1, 0)).reshape(KKC, Cout)
    w2d = w2d.astype(jnp.bfloat16)

    tile_r = _pick_tile_rows(Ho * Wo, N)
    if tile_r is None:
        # Fallback for odd geometries: one padded tile.  Zero rows add 0 to
        # the partial sums and the count below uses the true R.
        tile_r = _round_up(R, 8)
        patches = jnp.pad(patches, ((0, tile_r - R), (0, 0)))
    num_tiles = patches.shape[0] // tile_r

    cparams = pltpu.CompilerParams(
        dimension_semantics=("parallel",),
        vmem_limit_bytes=32 * 1024 * 1024)

    conv_flat, tile_sum, tile_ssq = pl.pallas_call(
        _conv_stats_kernel,
        out_shape=(jax.ShapeDtypeStruct((patches.shape[0], Cout), jnp.bfloat16),
                   jax.ShapeDtypeStruct((num_tiles, 1, Cout), jnp.float32),
                   jax.ShapeDtypeStruct((num_tiles, 1, Cout), jnp.float32)),
        grid=(num_tiles,),
        in_specs=[pl.BlockSpec((tile_r, KKC), lambda i: (i, 0)),
                  pl.BlockSpec((KKC, Cout), lambda i: (0, 0))],   # resident
        out_specs=(pl.BlockSpec((tile_r, Cout), lambda i: (i, 0)),
                   pl.BlockSpec((1, 1, Cout), lambda i: (i, 0, 0)),
                   pl.BlockSpec((1, 1, Cout), lambda i: (i, 0, 0))),
        compiler_params=cparams,
    )(patches, w2d)

    # ---- finish the global BN reduction (tiny: num_tiles x Cout, f32) ------
    count = jnp.float32(R)                     # true rows only
    mean = jnp.sum(tile_sum, axis=(0, 1)) / count
    ex2 = jnp.sum(tile_ssq, axis=(0, 1)) / count
    var = jnp.maximum(ex2 - mean * mean, 0.0)  # biased variance (BN training)
    scale = gamma.astype(jnp.float32) * jax.lax.rsqrt(var + eps)
    shift = beta.astype(jnp.float32) - mean * scale

    if patches.shape[0] != R:                  # only in the padded fallback
        conv_flat = conv_flat[:R]
    conv_nhwc = conv_flat.reshape(N, Ho, Wo, Cout)

    out_nhwc = pl.pallas_call(
        _bn_pool_kernel,
        out_shape=jax.ShapeDtypeStruct((N, Hq, Wq, Cout), jnp.float32),
        grid=(N,),
        in_specs=[pl.BlockSpec((1, Ho, Wo, Cout), lambda n: (n, 0, 0, 0)),
                  pl.BlockSpec((1, Cout), lambda n: (0, 0)),
                  pl.BlockSpec((1, Cout), lambda n: (0, 0))],
        out_specs=pl.BlockSpec((1, Hq, Wq, Cout), lambda n: (n, 0, 0, 0)),
        scratch_shapes=[pltpu.VMEM((Ho + 2, Wo + 2, Cout), jnp.float32),
                        pltpu.VMEM((Hq, Wo + 2, Cout), jnp.float32)],
        compiler_params=cparams,
    )(conv_nhwc, scale.reshape(1, Cout), shift.reshape(1, Cout))

    # NCHW to match the PyTorch module.  (Downstream token consumers could use
    # out_nhwc.reshape(N, Hq * Wq, Cout) directly and skip this transpose.)
    return jnp.transpose(out_nhwc, (0, 3, 1, 2))


# ---------------------------------------------------------------------------
# Pure-JAX reference (mirrors the bf16 MXU input precision of the kernel).
# ---------------------------------------------------------------------------
def _reference(x, w, gamma, beta, *, stride=2, eps=1e-5):
    pad = w.shape[-1] // 2
    conv = jax.lax.conv_general_dilated(
        x.astype(jnp.bfloat16), w.astype(jnp.bfloat16),
        (stride, stride), padding=((pad, pad), (pad, pad)),
        dimension_numbers=("NCHW", "OIHW", "NCHW"),
        preferred_element_type=jnp.float32)
    mean = jnp.mean(conv, axis=(0, 2, 3), keepdims=True)
    var = jnp.mean((conv - mean) ** 2, axis=(0, 2, 3), keepdims=True)
    y = (conv - mean) * jax.lax.rsqrt(var + eps)
    y = y * gamma.reshape(1, -1, 1, 1) + beta.reshape(1, -1, 1, 1)
    pooled = jax.lax.reduce_window(
        y, -jnp.inf, jax.lax.max,
        window_dimensions=(1, 1, 3, 3), window_strides=(1, 1, 2, 2),
        padding=((0, 0), (0, 0), (1, 1), (1, 1)))
    return pooled


if __name__ == "__main__":
    key = jax.random.PRNGKey(0)
    kx, kw, kg, kb = jax.random.split(key, 4)

    # Small shapes consistent with the module: in_chans=4, out_chans=32, k=7, s=2.
    N, Cin, H, W = 2, 4, 16, 16
    Cout, K, S = 32, 7, 2

    x = jax.random.normal(kx, (N, Cin, H, W), jnp.float32)
    fan_in = Cin * K * K
    conv_w = jax.random.normal(kw, (Cout, Cin, K, K), jnp.float32) / math.sqrt(fan_in)
    gamma = 1.0 + 0.1 * jax.random.normal(kg, (Cout,), jnp.float32)
    beta = 0.1 * jax.random.normal(kb, (Cout,), jnp.float32)

    out = jax.block_until_ready(
        image2tokens_forward(x, conv_w, gamma, beta, stride=S))

    ref = _reference(x, conv_w, gamma, beta, stride=S)
    assert out.shape == ref.shape == (N, Cout, 4, 4), (out.shape, ref.shape)
    max_err = float(jnp.max(jnp.abs(out - ref)))
    assert max_err < 2e-2, f"max abs err too large: {max_err}"

    print("KERNEL_OK")
</pallas_src>

<mosaic_0001>
module attributes {stable_mosaic.version = 11 : i64} {
  func.func @_conv_stats_kernel(%arg0: i32, %arg1: memref<64x196xbf16, #tpu.memory_space<vmem>>, %arg2: memref<196x32xbf16, #tpu.memory_space<vmem>>, %arg3: memref<64x32xbf16, #tpu.memory_space<vmem>>, %arg4: memref<1x1x32xf32, #tpu.memory_space<vmem>>, %arg5: memref<1x1x32xf32, #tpu.memory_space<vmem>>) attributes {dimension_semantics = [#tpu.dimension_semantics<parallel>], iteration_bounds = array<i64: 2>, scalar_prefetch = 0 : i64, scratch_operands = 0 : i64, tpu.core_type = #tpu.core_type<tc>, window_params = [{transform_indices = @transform_0, window_bounds = array<i64: 64, 196>}, {pipeline_mode = #tpu.pipeline_mode<synchronous>, transform_indices = @transform_1, window_bounds = array<i64: 196, 32>}, {transform_indices = @transform_2, window_bounds = array<i64: 64, 32>}, {transform_indices = @transform_3, window_bounds = array<i64: 1, 1, 32>}, {transform_indices = @transform_4, window_bounds = array<i64: 1, 1, 32>}]} {
    %c0 = arith.constant 0 : index
    %c0_0 = arith.constant 0 : index
    %0 = vector.load %arg1[%c0, %c0_0] : memref<64x196xbf16, #tpu.memory_space<vmem>>, vector<64x196xbf16>
    %c0_1 = arith.constant 0 : index
    %c0_2 = arith.constant 0 : index
    %1 = vector.load %arg2[%c0_1, %c0_2] : memref<196x32xbf16, #tpu.memory_space<vmem>>, vector<196x32xbf16>
    %cst = arith.constant dense<0.000000e+00> : vector<64x32xf32>
    %2 = tpu.matmul %0, %1, %cst {dimension_numbers = #tpu.dot_dimension_numbers<[1], [0], [0], [1], [0, 0, 1, 1], [], []>} : vector<64x196xbf16>, vector<196x32xbf16>, vector<64x32xf32> -> vector<64x32xf32>
    %3 = arith.truncf %2 : vector<64x32xf32> to vector<64x32xbf16>
    %c0_3 = arith.constant 0 : index
    %c0_4 = arith.constant 0 : index
    %4 = vector.load %arg3[%c0_3, %c0_4] : memref<64x32xbf16, #tpu.memory_space<vmem>>, vector<64x32xbf16>
    tpu.vector_store %arg3[%c0_3, %c0_4], %3 {strides = array<i32>} : memref<64x32xbf16, #tpu.memory_space<vmem>>, vector<64x32xbf16>,
    %cst_5 = arith.constant dense<0.000000e+00> : vector<32xf32>
    %5 = vector.multi_reduction <add>, %2, %cst_5 [0] : vector<64x32xf32> to vector<32xf32>
    %6 = vector.shape_cast %5 : vector<32xf32> to vector<1x32xf32>
    %c0_6 = arith.constant 0 : index
    %c0_7 = arith.constant 0 : index
    %c0_8 = arith.constant 0 : index
    %7 = vector.load %arg4[%c0_6, %c0_7, %c0_8] : memref<1x1x32xf32, #tpu.memory_space<vmem>>, vector<1x1x32xf32>
    %8 = vector.shape_cast %7 : vector<1x1x32xf32> to vector<1x32xf32>
    %9 = vector.shape_cast %6 : vector<1x32xf32> to vector<1x1x32xf32>
    tpu.vector_store %arg4[%c0_6, %c0_7, %c0_8], %9 {strides = array<i32>} : memref<1x1x32xf32, #tpu.memory_space<vmem>>, vector<1x1x32xf32>,
    %10 = arith.mulf %2, %2 : vector<64x32xf32>
    %cst_9 = arith.constant dense<0.000000e+00> : vector<32xf32>
    %11 = vector.multi_reduction <add>, %10, %cst_9 [0] : vector<64x32xf32> to vector<32xf32>
    %12 = vector.shape_cast %11 : vector<32xf32> to vector<1x32xf32>
    %c0_10 = arith.constant 0 : index
    %c0_11 = arith.constant 0 : index
    %c0_12 = arith.constant 0 : index
    %13 = vector.load %arg5[%c0_10, %c0_11, %c0_12] : memref<1x1x32xf32, #tpu.memory_space<vmem>>, vector<1x1x32xf32>
    %14 = vector.shape_cast %13 : vector<1x1x32xf32> to vector<1x32xf32>
    %15 = vector.shape_cast %12 : vector<1x32xf32> to vector<1x1x32xf32>
    tpu.vector_store %arg5[%c0_10, %c0_11, %c0_12], %15 {strides = array<i32>} : memref<1x1x32xf32, #tpu.memory_space<vmem>>, vector<1x1x32xf32>,
    return
  }
  func.func @transform_0(%arg0: i32) -> (i32, i32) {
    %c0_i32 = arith.constant 0 : i32
    %c0_i32_0 = arith.constant 0 : i32
    return %arg0, %c0_i32 : i32, i32
  }
  func.func @transform_1(%arg0: i32) -> (i32, i32) {
    %c0_i32 = arith.constant 0 : i32
    %c0_i32_0 = arith.constant 0 : i32
    %c0_i32_1 = arith.constant 0 : i32
    return %c0_i32, %c0_i32_0 : i32, i32
  }
  func.func @transform_2(%arg0: i32) -> (i32, i32) {
    %c0_i32 = arith.constant 0 : i32
    %c0_i32_0 = arith.constant 0 : i32
    return %arg0, %c0_i32 : i32, i32
  }
  func.func @transform_3(%arg0: i32) -> (i32, i32, i32) {
    %c0_i32 = arith.constant 0 : i32
    %c0_i32_0 = arith.constant 0 : i32
    %c0_i32_1 = arith.constant 0 : i32
    return %arg0, %c0_i32, %c0_i32_0 : i32, i32, i32
  }
  func.func @transform_4(%arg0: i32) -> (i32, i32, i32) {
    %c0_i32 = arith.constant 0 : i32
    %c0_i32_0 = arith.constant 0 : i32
    %c0_i32_1 = arith.constant 0 : i32
    return %arg0, %c0_i32, %c0_i32_0 : i32, i32, i32
  }
}

module attributes {stable_mosaic.version = 11 : i64} {
  func.func @_bn_pool_kernel(%arg0: i32, %arg1: memref<1x8x8x32xbf16, #tpu.memory_space<vmem>>, %arg2: memref<1x32xf32, #tpu.memory_space<vmem>>, %arg3: memref<1x32xf32, #tpu.memory_space<vmem>>, %arg4: memref<1x4x4x32xf32, #tpu.memory_space<vmem>>, %arg5: memref<10x10x32xf32, #tpu.memory_space<vmem>>, %arg6: memref<4x10x32xf32, #tpu.memory_space<vmem>>) attributes {dimension_semantics = [#tpu.dimension_semantics<parallel>], iteration_bounds = array<i64: 2>, scalar_prefetch = 0 : i64, scratch_operands = 2 : i64, tpu.core_type = #tpu.core_type<tc>, window_params = [{transform_indices = @transform_0, window_bounds = array<i64: 1, 8, 8, 32>}, {pipeline_mode = #tpu.pipeline_mode<synchronous>, transform_indices = @transform_1, window_bounds = array<i64: 1, 32>}, {pipeline_mode = #tpu.pipeline_mode<synchronous>, transform_indices = @transform_2, window_bounds = array<i64: 1, 32>}, {transform_indices = @transform_3, window_bounds = array<i64: 1, 4, 4, 32>}]} {
    %c0 = arith.constant 0 : index
    %c0_0 = arith.constant 0 : index
    %c0_1 = arith.constant 0 : index
    %c0_2 = arith.constant 0 : index
    %0 = vector.load %arg1[%c0, %c0_0, %c0_1, %c0_2] : memref<1x8x8x32xbf16, #tpu.memory_space<vmem>>, vector<1x8x8x32xbf16>
    %1 = vector.shape_cast %0 : vector<1x8x8x32xbf16> to vector<8x8x32xbf16>
    %2 = arith.extf %1 : vector<8x8x32xbf16> to vector<8x8x32xf32>
    %c0_3 = arith.constant 0 : index
    %c0_4 = arith.constant 0 : index
    %3 = vector.load %arg2[%c0_3, %c0_4] : memref<1x32xf32, #tpu.memory_space<vmem>>, vector<1x32xf32>
    %4 = vector.shape_cast %3 : vector<1x32xf32> to vector<1x1x32xf32>
    %5 = vector.broadcast %4 : vector<1x1x32xf32> to vector<8x8x32xf32>
    %6 = arith.mulf %2, %5 : vector<8x8x32xf32>
    %c0_5 = arith.constant 0 : index
    %c0_6 = arith.constant 0 : index
    %7 = vector.load %arg3[%c0_5, %c0_6] : memref<1x32xf32, #tpu.memory_space<vmem>>, vector<1x32xf32>
    %8 = vector.shape_cast %7 : vector<1x32xf32> to vector<1x1x32xf32>
    %9 = vector.broadcast %8 : vector<1x1x32xf32> to vector<8x8x32xf32>
    %10 = arith.addf %6, %9 : vector<8x8x32xf32>
    %cst = arith.constant 0xFF800000 : f32
    %11 = vector.broadcast %cst : f32 to vector<10x10x32xf32>
    %c0_7 = arith.constant 0 : index
    %c0_8 = arith.constant 0 : index
    %c0_9 = arith.constant 0 : index
    %12 = vector.load %arg5[%c0_7, %c0_8, %c0_9] : memref<10x10x32xf32, #tpu.memory_space<vmem>>, vector<10x10x32xf32>
    tpu.vector_store %arg5[%c0_7, %c0_8, %c0_9], %11 {strides = array<i32>} : memref<10x10x32xf32, #tpu.memory_space<vmem>>, vector<10x10x32xf32>,
    %c1 = arith.constant 1 : index
    %c1_10 = arith.constant 1 : index
    %c0_11 = arith.constant 0 : index
    %13 = vector.load %arg5[%c1, %c1_10, %c0_11] : memref<10x10x32xf32, #tpu.memory_space<vmem>>, vector<8x8x32xf32>
    tpu.vector_store %arg5[%c1, %c1_10, %c0_11], %10 {strides = array<i32>} : memref<10x10x32xf32, #tpu.memory_space<vmem>>, vector<8x8x32xf32>,
    %c0_12 = arith.constant 0 : index
    %c0_13 = arith.constant 0 : index
    %c0_14 = arith.constant 0 : index
    %14 = tpu.strided_load %arg5[%c0_12, %c0_13, %c0_14] {strides = array<i32: 2, 1, 1>} : memref<10x10x32xf32, #tpu.memory_space<vmem>>, vector<4x10x32xf32>
    %c1_15 = arith.constant 1 : index
    %c0_16 = arith.constant 0 : index
    %c0_17 = arith.constant 0 : index
    %15 = tpu.strided_load %arg5[%c1_15, %c0_16, %c0_17] {strides = array<i32: 2, 1, 1>} : memref<10x10x32xf32, #tpu.memory_space<vmem>>, vector<4x10x32xf32>
    %16 = arith.maximumf %14, %15 : vector<4x10x32xf32>
    %c2 = arith.constant 2 : index
    %c0_18 = arith.constant 0 : index
    %c0_19 = arith.constant 0 : index
    %17 = tpu.strided_load %arg5[%c2, %c0_18, %c0_19] {strides = array<i32: 2, 1, 1>} : memref<10x10x32xf32, #tpu.memory_space<vmem>>, vector<4x10x32xf32>
    %18 = arith.maximumf %16, %17 : vector<4x10x32xf32>
    %c0_20 = arith.constant 0 : index
    %c0_21 = arith.constant 0 : index
    %c0_22 = arith.constant 0 : index
    %19 = vector.load %arg6[%c0_20, %c0_21, %c0_22] : memref<4x10x32xf32, #tpu.memory_space<vmem>>, vector<4x10x32xf32>
    tpu.vector_store %arg6[%c0_20, %c0_21, %c0_22], %18 {strides = array<i32>} : memref<4x10x32xf32, #tpu.memory_space<vmem>>, vector<4x10x32xf32>,
    %c0_23 = arith.constant 0 : index
    %c0_24 = arith.constant 0 : index
    %c0_25 = arith.constant 0 : index
    %20 = tpu.strided_load %arg6[%c0_23, %c0_24, %c0_25] {strides = array<i32: 1, 2, 1>} : memref<4x10x32xf32, #tpu.memory_space<vmem>>, vector<4x4x32xf32>
    %c0_26 = arith.constant 0 : index
    %c1_27 = arith.constant 1 : index
    %c0_28 = arith.constant 0 : index
    %21 = tpu.strided_load %arg6[%c0_26, %c1_27, %c0_28] {strides = array<i32: 1, 2, 1>} : memref<4x10x32xf32, #tpu.memory_space<vmem>>, vector<4x4x32xf32>
    %22 = arith.maximumf %20, %21 : vector<4x4x32xf32>
    %c0_29 = arith.constant 0 : index
    %c2_30 = arith.constant 2 : index
    %c0_31 = arith.constant 0 : index
    %23 = tpu.strided_load %arg6[%c0_29, %c2_30, %c0_31] {strides = array<i32: 1, 2, 1>} : memref<4x10x32xf32, #tpu.memory_space<vmem>>, vector<4x4x32xf32>
    %24 = arith.maximumf %22, %23 : vector<4x4x32xf32>
    %c0_32 = arith.constant 0 : index
    %c0_33 = arith.constant 0 : index
    %c0_34 = arith.constant 0 : index
    %c0_35 = arith.constant 0 : index
    %25 = vector.load %arg4[%c0_32, %c0_33, %c0_34, %c0_35] : memref<1x4x4x32xf32, #tpu.memory_space<vmem>>, vector<1x4x4x32xf32>
    %26 = vector.shape_cast %25 : vector<1x4x4x32xf32> to vector<4x4x32xf32>
    %27 = vector.shape_cast %24 : vector<4x4x32xf32> to vector<1x4x4x32xf32>
    tpu.vector_store %arg4[%c0_32, %c0_33, %c0_34, %c0_35], %27 {strides = array<i32>} : memref<1x4x4x32xf32, #tpu.memory_space<vmem>>, vector<1x4x4x32xf32>,
    return
  }
  func.func @transform_0(%arg0: i32) -> (i32, i32, i32, i32) {
    %c0_i32 = arith.constant 0 : i32
    %c0_i32_0 = arith.constant 0 : i32
    %c0_i32_1 = arith.constant 0 : i32
    %c0_i32_2 = arith.constant 0 : i32
    return %arg0, %c0_i32, %c0_i32_0, %c0_i32_1 : i32, i32, i32, i32
  }
  func.func @transform_1(%arg0: i32) -> (i32, i32) {
    %c0_i32 = arith.constant 0 : i32
    %c0_i32_0 = arith.constant 0 : i32
    %c0_i32_1 = arith.constant 0 : i32
    return %c0_i32, %c0_i32_0 : i32, i32
  }
  func.func @transform_2(%arg0: i32) -> (i32, i32) {
    %c0_i32 = arith.constant 0 : i32
    %c0_i32_0 = arith.constant 0 : i32
    %c0_i32_1 = arith.constant 0 : i32
    return %c0_i32, %c0_i32_0 : i32, i32
  }
  func.func @transform_3(%arg0: i32) -> (i32, i32, i32, i32) {
    %c0_i32 = arith.constant 0 : i32
    %c0_i32_0 = arith.constant 0 : i32
    %c0_i32_1 = arith.constant 0 : i32
    %c0_i32_2 = arith.constant 0 : i32
    return %arg0, %c0_i32, %c0_i32_0, %c0_i32_1 : i32, i32, i32, i32
  }
}

</mosaic_0001>

<llo_original>
// kernel: image2tokens_forward.3
$region0: #{image2tokens_forward.3}
  #allocation0 [shape = 'u32[]', space=smem, size = 0x4, offset = 0x4, fixed_abs, tag = 'smem constant byte address 0x4 - core index']
  #allocation1 [shape = 'u32[144,128]{1,0:T(1,128)}', space=vmem, size = 0x12000, scoped, tag = 'internal scratch']
  #allocation2 [shape = 'f32[10,10,32]{2,1,0:T(8,128)}', space=vmem, size = 0x14000, scoped, tag = 'scratch operand']
  #allocation3 [shape = 'f32[4,10,32]{2,1,0:T(8,128)}', space=vmem, size = 0x8000, scoped, tag = 'scratch operand']
  %s0 = inlined_call_operand.vmem [shape: bf16[2,8,8,32], index: 0, kind: input, shape index: {}]
  %s1 = inlined_call_operand.vmem [shape: f32[1,32], index: 1, kind: input, shape index: {}]
  %s2 = inlined_call_operand.vmem [shape: f32[1,32], index: 2, kind: input, shape index: {}]
  %s3 = inlined_call_operand.hbm [shape: f32[2,4,4,32], index: 3, kind: output, shape index: {}]
  %s4 = sld [smem:[#allocation0]]
  $region45: #{image2tokens_forward.3} parent=0
    _
  %s6 = ssub.s32 1, %s4
  %s7 = scalar_select 0, %s6, %s4
  $region1: #{image2tokens_forward.3} parent=0
    #allocation4 [shape = 'u8[16384]{0}', space=vmem, size = 0x4000, scoped, tag = 'output window, operand 0']
    #allocation5 [shape = 's32[2]{0}', space=sflag, size = 0x8, scoped, tag = 'scoped memory for image2tokens_forward.3']
    %8 = vsyncpa [#allocation5], 0
    %s9 = scalar_lea.sflag [#allocation5], 1
    %10 = vsyncpa %s9, 0
    loop: start=0, step=1, limit=4
    $region2: #{image2tokens_forward.3} parent=1 // loop_pre_header
      _
    $region3: #{image2tokens_forward.3} parent=1 // loop_header
      %s12 = sphi 0, %s16
      %p13 = scmp.ge.s32.totalorder %s12, 4
      %s22 = sphi 0, %s24
      %s25 = sphi 0, %s22
      %s26 = sphi 0, %s25
      %s42 = sphi 0, %s26
      %s46 = sphi 0, %s46
      %s48 = sphi 0, %s46
      %s49 = sphi 0, %s48
      %s63 = sphi 0, %s49
      %s67 = sphi 0, %s67
      %s69 = sphi 0, %s67
      %s70 = sphi 0, %s69
      %s84 = sphi 0, %s70
      %s90 = sphi 0, %s92
      %s93 = sphi 0, %s90
      %s94 = sphi 0, %s93
      %s110 = sphi 0, %s94
    $region4: #{image2tokens_forward.3} parent=1 // loop_header_branch
      %15 = sbr.rel (%p13) target = $region8
    $region5: #{image2tokens_forward.3} parent=1 // loop_body
      %s17 = ssub.s32 %s12, 1
      %s18 = ssub.s32 %s12, 2
      %s19 = sadd.s32 %s12, 1
      %s20 = ssub.s32 %s12, %s19
      %p21 = scmp.eq.s32.totalorder %s20, 0
      %s23 = sadd.s32 %s22, 1
      %s24 = scalar_select %p21, %s22, %s23
      %p27 = pneg %p21
      %p28 = scmp.eq.s32.totalorder %s12, 1
      %p29 = por %p27, %p28
      %p30 = scmp.ne.s32.totalorder %s22, %s25
      %p31 = scmp.eq.s32.totalorder %s12, 0
      %p32 = por %p30, %p31
      %p33 = scmp.ne.s32.totalorder %s22, %s25
      %p34 = scmp.eq.s32.totalorder %s17, 1
      %p35 = por %p33, %p34
      %p36 = scmp.ne.s32.totalorder %s25, %s26
      %p37 = scmp.eq.s32.totalorder %s17, 0
      %p38 = por %p36, %p37
      %p39 = scmp.ne.s32.totalorder %s25, %s26
      %p40 = scmp.eq.s32.totalorder %s18, 1
      %p41 = por %p39, %p40
      %p43 = scmp.ne.s32.totalorder %s26, %s42
      %p44 = scmp.eq.s32.totalorder %s18, 0
      %p45 = por %p43, %p44
      %s47 = sadd.s32 %s46, 1
      %p50 = scmp.eq.s32.totalorder %s12, 1
      %p51 = scmp.ne.s32.totalorder %s46, %s48
      %p52 = scmp.eq.s32.totalorder %s12, 0
      %p53 = por %p51, %p52
      %p54 = scmp.ne.s32.totalorder %s46, %s48
      %p55 = scmp.eq.s32.totalorder %s17, 1
      %p56 = por %p54, %p55
      %p57 = scmp.ne.s32.totalorder %s48, %s49
      %p58 = scmp.eq.s32.totalorder %s17, 0
      %p59 = por %p57, %p58
      %p60 = scmp.ne.s32.totalorder %s48, %s49
      %p61 = scmp.eq.s32.totalorder %s18, 1
      %p62 = por %p60, %p61
      %p64 = scmp.ne.s32.totalorder %s49, %s63
      %p65 = scmp.eq.s32.totalorder %s18, 0
      %p66 = por %p64, %p65
      %s68 = sadd.s32 %s67, 1
      %p71 = scmp.eq.s32.totalorder %s12, 1
      %p72 = scmp.ne.s32.totalorder %s67, %s69
      %p73 = scmp.eq.s32.totalorder %s12, 0
      %p74 = por %p72, %p73
      %p75 = scmp.ne.s32.totalorder %s67, %s69
      %p76 = scmp.eq.s32.totalorder %s17, 1
      %p77 = por %p75, %p76
      %p78 = scmp.ne.s32.totalorder %s69, %s70
      %p79 = scmp.eq.s32.totalorder %s17, 0
      %p80 = por %p78, %p79
      %p81 = scmp.ne.s32.totalorder %s69, %s70
      %p82 = scmp.eq.s32.totalorder %s18, 1
      %p83 = por %p81, %p82
      %p85 = scmp.ne.s32.totalorder %s70, %s84
      %p86 = scmp.eq.s32.totalorder %s18, 0
      %p87 = por %p85, %p86
      %s88 = ssub.s32 %s12, %s19
      %p89 = scmp.eq.s32.totalorder %s88, 0
      %s91 = sadd.s32 %s90, 1
      %s92 = scalar_select %p89, %s90, %s91
      %p95 = pneg %p89
      %p96 = scmp.eq.s32.totalorder %s12, 1
      %p97 = por %p95, %p96
      %p98 = scmp.ne.s32.totalorder %s90, %s93
      %p99 = scmp.eq.s32.totalorder %s12, 0
      %p100 = por %p98, %p99
      %p101 = scmp.ne.s32.totalorder %s90, %s93
      %p102 = scmp.eq.s32.totalorder %s17, 1
      %p103 = por %p101, %p102
      %p104 = scmp.ne.s32.totalorder %s93, %s94
      %p105 = scmp.eq.s32.totalorder %s17, 0
      %p106 = por %p104, %p105
      %p107 = scmp.ne.s32.totalorder %s93, %s94
      %p108 = scmp.eq.s32.totalorder %s18, 1
      %p109 = por %p107, %p108
      %p111 = scmp.ne.s32.totalorder %s94, %s110
      %p112 = scmp.eq.s32.totalorder %s18, 0
      %p113 = por %p111, %p112
      %p114 = scmp.le.s32.totalorder 1, %s12
      %p115 = scmp.lt.s32.totalorder %s12, 3
      %p116 = pnand %p114, %p115
      %p117 = pneg %p116
      // Predicated region
      $region9: #{image2tokens_forward.3} parent=5 // pred_check
        _
      $region10: #{image2tokens_forward.3} parent=5 // pred_check_branch
        %119 = sbr.rel (%p116) target = $region12
      $region11: #{image2tokens_forward.3} parent=5 // pred_region
        %s120 = ssub.s32 %s12, 1
        // Predicated region
        $region13: #{image2tokens_forward.3} parent=11 // pred_check
          %p121 = pneg %p59
        $region14: #{image2tokens_forward.3} parent=11 // pred_check_branch
          %123 = sbr.rel (%p121) target = $region16
        $region15: #{image2tokens_forward.3} parent=11 // pred_region
          _
        $region16: #{image2tokens_forward.3} parent=11 // pred_fallthru
          _
        // Predicated region
        $region17: #{image2tokens_forward.3} parent=11 // pred_check
          %p124 = pneg %p80
        $region18: #{image2tokens_forward.3} parent=11 // pred_check_branch
          %126 = sbr.rel (%p124) target = $region20
        $region19: #{image2tokens_forward.3} parent=11 // pred_region
          _
        $region20: #{image2tokens_forward.3} parent=11 // pred_fallthru
          _
      $region12: #{image2tokens_forward.3} parent=5 // pred_fallthru
        _
      %p127 = scmp.lt.s32.totalorder %s12, 2
      // Predicated region
      $region21: #{image2tokens_forward.3} parent=5 // pred_check
        %p128 = pneg %p127
      $region22: #{image2tokens_forward.3} parent=5 // pred_check_branch
        %130 = sbr.rel (%p128) target = $region24
      $region23: #{image2tokens_forward.3} parent=5 // pred_region
        // Predicated region
        $region25: #{image2tokens_forward.3} parent=23 // pred_check
          %p131 = pneg %p32
        $region26: #{image2tokens_forward.3} parent=23 // pred_check_branch
          %133 = sbr.rel (%p131) target = $region28
        $region27: #{image2tokens_forward.3} parent=23 // pred_region
          %p134 = scmp.lt.s32.totalorder %s12, 1
          %s135 = scalar_select %p134, %s12, 1
          %s136 = smul.addr %s135, 8
          %s137 = smul.addr %s136, 4
          %s138 = scalar_lea.vmem %s0, %s137
        $region28: #{image2tokens_forward.3} parent=23 // pred_fallthru
          _
      $region24: #{image2tokens_forward.3} parent=5 // pred_fallthru
        _
      %p139 = scmp.le.s32.totalorder 1, %s12
      %p140 = scmp.lt.s32.totalorder %s12, 3
      %p141 = pnand %p139, %p140
      %p142 = pneg %p141
      // Predicated region
      $region29: #{image2tokens_forward.3} parent=5 // pred_check
        _
      $region30: #{image2tokens_forward.3} parent=5 // pred_check_branch
        %144 = sbr.rel (%p141) target = $region32
      $region31: #{image2tokens_forward.3} parent=5 // pred_region
        %s145 = ssub.s32 %s12, 1
        %p146 = scmp.lt.s32.totalorder %s17, 1
        %s147 = scalar_select %p146, %s17, 1
        %s148 = smul.addr %s147, 8
        %s149 = smul.addr %s148, 4
        %s150 = scalar_lea.vmem %s0, %s149
        %p151 = pneg %p38
        %p152 = pneg %p35
        %p153 = pneg %p59
        %p154 = pneg %p56
        %p155 = pneg %p80
        %p156 = pneg %p77
        %p157 = pneg %p106
        %p158 = pneg %p103
        %s159 = sand.u32 %s93, 1
        %s160 = scalar_lea.sflag [#allocation5], %s159
        %s161 = sand.u32 %s93, 1
        %s162 = smul.addr %s161, 16
        %s163 = scalar_lea.vmem [#allocation4], %s162
        %p164 = scmp.lt.s32.totalorder %s17, 1
        %s165 = scalar_select %p164, %s17, 1
        %s166 = smul.addr %s165, 8
        %s167 = smul.addr %s166, 4
        %s168 = scalar_lea.vmem %s0, %s167
        %v169 = vld [vmem:[%s168] sm:$0xf]
        %v170 = vld [vmem:[%s168 + $0x4] sm:$0xf]
        %v171 = vld [vmem:[%s168 + $0x8] sm:$0xf]
        %v172 = vld [vmem:[%s168 + $0xc] sm:$0xf]
        %v173 = vld [vmem:[%s168 + $0x10] sm:$0xf]
        %v174 = vld [vmem:[%s168 + $0x14] sm:$0xf]
        %v175 = vld [vmem:[%s168 + $0x18] sm:$0xf]
        %v176 = vld [vmem:[%s168 + $0x1c] sm:$0xf]
        %v177 = vunpack.c.l.bf16 %v169
        %v178 = vunpack.c.l.bf16 %v170
        %v179 = vunpack.c.l.bf16 %v171
        %v180 = vunpack.c.l.bf16 %v172
        %v181 = vunpack.c.l.bf16 %v173
        %v182 = vunpack.c.l.bf16 %v174
        %v183 = vunpack.c.l.bf16 %v175
        %v184 = vunpack.c.l.bf16 %v176
        %v185 = vld [vmem:[%s1] sm:$0x1]
        %v187 = vlaneseq
        %v188 = vshrl.u32 %v187, 7
        %v189 = vsub.s32 0, %v188
        %v190 = vrot.slane %v185, %v189
        %v192 = vmul.f32 %v177, %v190
        %v193 = vmul.f32 %v178, %v190
        %v194 = vmul.f32 %v179, %v190
        %v195 = vmul.f32 %v180, %v190
        %v196 = vmul.f32 %v181, %v190
        %v197 = vmul.f32 %v182, %v190
        %v198 = vmul.f32 %v183, %v190
        %v199 = vmul.f32 %v184, %v190
        %v200 = vld [vmem:[%s2] sm:$0x1]
        %v202 = vlaneseq
        %v203 = vshrl.u32 %v202, 7
        %v204 = vsub.s32 0, %v203
        %v205 = vrot.slane %v200, %v204
        %v207 = vadd.f32 %v192, %v205
        %v208 = vadd.f32 %v193, %v205
        %v209 = vadd.f32 %v194, %v205
        %v210 = vadd.f32 %v195, %v205
        %v211 = vadd.f32 %v196, %v205
        %v212 = vadd.f32 %v197, %v205
        %v213 = vadd.f32 %v198, %v205
        %v214 = vadd.f32 %v199, %v205
        %vm215 = vcmask 261120
        %216 = vst.msk [vmem:[#allocation2] sm:$0xff] %vm215, -inf
        %vm217 = vcmask 254976
        %218 = vst.msk [vmem:[#allocation2 + $0x8] sm:$0x3] %vm217, -inf
        %219 = vst.msk [vmem:[#allocation2 + $0x10] sm:$0xff] %vm215, -inf
        %220 = vst.msk [vmem:[#allocation2 + $0x18] sm:$0x3] %vm217, -inf
        %221 = vst.msk [vmem:[#allocation2 + $0x20] sm:$0xff] %vm215, -inf
        %222 = vst.msk [vmem:[#allocation2 + $0x28] sm:$0x3] %vm217, -inf
        %223 = vst.msk [vmem:[#allocation2 + $0x30] sm:$0xff] %vm215, -inf
        %224 = vst.msk [vmem:[#allocation2 + $0x38] sm:$0x3] %vm217, -inf
        %225 = vst.msk [vmem:[#allocation2 + $0x40] sm:$0xff] %vm215, -inf
        %226 = vst.msk [vmem:[#allocation2 + $0x48] sm:$0x3] %vm217, -inf
        %227 = vst.msk [vmem:[#allocation2 + $0x50] sm:$0xff] %vm215, -inf
        %228 = vst.msk [vmem:[#allocation2 + $0x58] sm:$0x3] %vm217, -inf
        %229 = vst.msk [vmem:[#allocation2 + $0x60] sm:$0xff] %vm215, -inf
        %230 = vst.msk [vmem:[#allocation2 + $0x68] sm:$0x3] %vm217, -inf
        %231 = vst.msk [vmem:[#allocation2 + $0x70] sm:$0xff] %vm215, -inf
        %232 = vst.msk [vmem:[#allocation2 + $0x78] sm:$0x3] %vm217, -inf
        %233 = vst.msk [vmem:[#allocation2 + $0x80] sm:$0xff] %vm215, -inf
        %234 = vst.msk [vmem:[#allocation2 + $0x88] sm:$0x3] %vm217, -inf
        %235 = vst.msk [vmem:[#allocation2 + $0x90] sm:$0xff] %vm215, -inf
        %236 = vst.msk [vmem:[#allocation2 + $0x98] sm:$0x3] %vm217, -inf
        %s237 = scalar_lea.vmem [#allocation2], 16
        %238 = vst.msk [vmem:[%s237 + $0x1] sm:$0xff] %vm215, %v207
        %239 = vst.msk [vmem:[%s237 + $0x11] sm:$0xff] %vm215, %v208
        %240 = vst.msk [vmem:[%s237 + $0x21] sm:$0xff] %vm215, %v209
        %241 = vst.msk [vmem:[%s237 + $0x31] sm:$0xff] %vm215, %v210
        %242 = vst.msk [vmem:[%s237 + $0x41] sm:$0xff] %vm215, %v211
        %243 = vst.msk [vmem:[%s237 + $0x51] sm:$0xff] %vm215, %v212
        %244 = vst.msk [vmem:[%s237 + $0x61] sm:$0xff] %vm215, %v213
        %245 = vst.msk [vmem:[%s237 + $0x71] sm:$0xff] %vm215, %v214
        %v246 = vld [vmem:[#allocation2] sm:$0xff]
        %v247 = vld [vmem:[#allocation2 + $0x8] sm:$0x3]
        %v248 = vld [vmem:[#allocation2 + $0x20] sm:$0xff]
        %v249 = vld [vmem:[#allocation2 + $0x28] sm:$0x3]
        %v250 = vld [vmem:[#allocation2 + $0x40] sm:$0xff]
        %v251 = vld [vmem:[#allocation2 + $0x48] sm:$0x3]
        %v252 = vld [vmem:[#allocation2 + $0x60] sm:$0xff]
        %v253 = vld [vmem:[#allocation2 + $0x68] sm:$0x3]
        %v254 = vld [vmem:[%s237] sm:$0xff]
        %v255 = vld [vmem:[%s237 + $0x8] sm:$0x3]
        %v256 = vld [vmem:[%s237 + $0x20] sm:$0xff]
        %v257 = vld [vmem:[%s237 + $0x28] sm:$0x3]
        %v258 = vld [vmem:[%s237 + $0x40] sm:$0xff]
        %v259 = vld [vmem:[%s237 + $0x48] sm:$0x3]
        %v260 = vld [vmem:[%s237 + $0x60] sm:$0xff]
        %v261 = vld [vmem:[%s237 + $0x68] sm:$0x3]
        %v262 = vmax.f32 %v246, %v254
        %v263 = vmax.f32 %v247, %v255
        %v264 = vmax.f32 %v248, %v256
        %v265 = vmax.f32 %v249, %v257
        %v266 = vmax.f32 %v250, %v258
        %v267 = vmax.f32 %v251, %v259
        %v268 = vmax.f32 %v252, %v260
        %v269 = vmax.f32 %v253, %v261
        %s270 = scalar_lea.vmem [#allocation2], 32
        %v271 = vld [vmem:[%s270] sm:$0xff]
        %v272 = vld [vmem:[%s270 + $0x8] sm:$0x3]
        %v273 = vld [vmem:[%s270 + $0x20] sm:$0xff]
        %v274 = vld [vmem:[%s270 + $0x28] sm:$0x3]
        %v275 = vld [vmem:[%s270 + $0x40] sm:$0xff]
        %v276 = vld [vmem:[%s270 + $0x48] sm:$0x3]
        %v277 = vld [vmem:[%s270 + $0x60] sm:$0xff]
        %v278 = vld [vmem:[%s270 + $0x68] sm:$0x3]
        %v279 = vmax.f32 %v262, %v271
        %v280 = vmax.f32 %v263, %v272
        %v281 = vmax.f32 %v264, %v273
        %v282 = vmax.f32 %v265, %v274
        %v283 = vmax.f32 %v266, %v275
        %v284 = vmax.f32 %v267, %v276
        %v285 = vmax.f32 %v268, %v277
        %v286 = vmax.f32 %v269, %v278
        %287 = vst.msk [vmem:[#allocation3] sm:$0xff] %vm215, %v279
        %288 = vst.msk [vmem:[#allocation3 + $0x8] sm:$0x3] %vm217, %v280
        %289 = vst.msk [vmem:[#allocation3 + $0x10] sm:$0xff] %vm215, %v281
        %290 = vst.msk [vmem:[#allocation3 + $0x18] sm:$0x3] %vm217, %v282
        %291 = vst.msk [vmem:[#allocation3 + $0x20] sm:$0xff] %vm215, %v283
        %292 = vst.msk [vmem:[#allocation3 + $0x28] sm:$0x3] %vm217, %v284
        %293 = vst.msk [vmem:[#allocation3 + $0x30] sm:$0xff] %vm215, %v285
        %294 = vst.msk [vmem:[#allocation3 + $0x38] sm:$0x3] %vm217, %v286
        %v295 = vld [vmem:[#allocation3] ss:$2 sm:$0xf]
        %s296 = scalar_lea.vmem [#allocation3], 16
        %v297 = vld [vmem:[%s296] ss:$2 sm:$0xf]
        %s298 = scalar_lea.vmem [#allocation3], 32
        %v299 = vld [vmem:[%s298] ss:$2 sm:$0xf]
        %s300 = scalar_lea.vmem [#allocation3], 48
        %v301 = vld [vmem:[%s300] ss:$2 sm:$0xf]
        %s302 = scalar_lea.vmem [#allocation3], 1
        %v303 = vld [vmem:[%s302] ss:$2 sm:$0xf]
        %s304 = scalar_lea.vmem [#allocation3], 17
        %v305 = vld [vmem:[%s304] ss:$2 sm:$0xf]
        %s306 = scalar_lea.vmem [#allocation3], 33
        %v307 = vld [vmem:[%s306] ss:$2 sm:$0xf]
        %s308 = scalar_lea.vmem [#allocation3], 49
        %v309 = vld [vmem:[%s308] ss:$2 sm:$0xf]
        %v310 = vmax.f32 %v295, %v303
        %v311 = vmax.f32 %v297, %v305
        %v312 = vmax.f32 %v299, %v307
        %v313 = vmax.f32 %v301, %v309
        %s314 = scalar_lea.vmem [#allocation3], 2
        %v315 = vld [vmem:[%s314] ss:$2 sm:$0xf]
        %s316 = scalar_lea.vmem [#allocation3], 18
        %v317 = vld [vmem:[%s316] ss:$2 sm:$0xf]
        %s318 = scalar_lea.vmem [#allocation3], 34
        %v319 = vld [vmem:[%s318] ss:$2 sm:$0xf]
        %s320 = scalar_lea.vmem [#allocation3], 50
        %v321 = vld [vmem:[%s320] ss:$2 sm:$0xf]
        %v322 = vmax.f32 %v310, %v315
        %v323 = vmax.f32 %v311, %v317
        %v324 = vmax.f32 %v312, %v319
        %v325 = vmax.f32 %v313, %v321
        %vm326 = vcmask 257024
        %327 = vst.msk [vmem:[%s163] sm:$0xf] %vm326, %v322
        %328 = vst.msk [vmem:[%s163 + $0x4] sm:$0xf] %vm326, %v323
        %329 = vst.msk [vmem:[%s163 + $0x8] sm:$0xf] %vm326, %v324
        %330 = vst.msk [vmem:[%s163 + $0xc] sm:$0xf] %vm326, %v325
        %s331 = sand.u32 %s93, 1
        %s332 = scalar_lea.sflag [#allocation5], %s331
        %s333 = sand.u32 %s93, 1
        %s334 = smul.addr %s333, 16
        %s335 = scalar_lea.vmem [#allocation4], %s334
        // Predicated region
        $region33: #{image2tokens_forward.3} parent=31 // pred_check
          %p336 = pneg %p103
        $region34: #{image2tokens_forward.3} parent=31 // pred_check_branch
          %338 = sbr.rel (%p336) target = $region36
        $region35: #{image2tokens_forward.3} parent=31 // pred_region
          %s340 = ssub.s32 256, 256
          %341 = vsyncadd %s332, %s340
          %s342 = smul.addr %s17, 4
          %s343 = smul.addr %s342, 64
          %s344 = scalar_lea.hbm %s3, %s343
          %s345 = sshll.u32 %s335, 4
          %s346 = int_to_ptr.vmem [resolvable:$true] %s345
          %351 = dma.vmem_to_hbm [thread:$0]  %s346, 256, %s344, %s332, 64, 64, 4
        $region36: #{image2tokens_forward.3} parent=31 // pred_fallthru
          _
      $region32: #{image2tokens_forward.3} parent=5 // pred_fallthru
        _
      %p352 = scmp.le.s32.totalorder 2, %s12
      // Predicated region
      $region37: #{image2tokens_forward.3} parent=5 // pred_check
        %p353 = pneg %p352
      $region38: #{image2tokens_forward.3} parent=5 // pred_check_branch
        %355 = sbr.rel (%p353) target = $region40
      $region39: #{image2tokens_forward.3} parent=5 // pred_region
        %s356 = ssub.s32 %s12, 2
        // Predicated region
        $region41: #{image2tokens_forward.3} parent=39 // pred_check
          %p357 = pneg %p109
        $region42: #{image2tokens_forward.3} parent=39 // pred_check_branch
          %359 = sbr.rel (%p357) target = $region44
        $region43: #{image2tokens_forward.3} parent=39 // pred_region
          %s360 = sand.u32 %s94, 1
          %s361 = scalar_lea.sflag [#allocation5], %s360
          %s362 = sand.u32 %s94, 1
          %s363 = smul.addr %s362, 16
          %s364 = scalar_lea.vmem [#allocation4], %s363
          %365 = dma.done %s361, 256
        $region44: #{image2tokens_forward.3} parent=39 // pred_fallthru
          _
      $region40: #{image2tokens_forward.3} parent=5 // pred_fallthru
        _
    $region6: #{image2tokens_forward.3} parent=1 // loop_footer
      %s16 = sadd.s32 1, %s12
    $region7: #{image2tokens_forward.3} parent=1 // loop_footer_branch
      %11 = sbr.rel target = $region3
    $region8: #{image2tokens_forward.3} parent=1 // loop_exit
      _
    %366 = vsyncpa [#allocation5], 1
    %s367 = scalar_lea.sflag [#allocation5], 1
    %368 = vsyncpa %s367, 1

// kernel: image2tokens_forward.2
$region0: #{image2tokens_forward.2}
  #allocation0 [shape = 'u32[]', space=smem, size = 0x4, offset = 0x4, fixed_abs, tag = 'smem constant byte address 0x4 - core index']
  #allocation1 [shape = 'u32[144,128]{1,0:T(1,128)}', space=vmem, size = 0x12000, scoped, tag = 'internal scratch']
  %s0 = inlined_call_operand.vmem [shape: bf16[128,196], index: 0, kind: input, shape index: {}]
  %s1 = inlined_call_operand.vmem [shape: bf16[196,32], index: 1, kind: input, shape index: {}]
  %s2 = inlined_call_operand.vmem [shape: bf16[128,32], index: 2, kind: output, shape index: {0}]
  %s3 = inlined_call_operand.vmem [shape: f32[2,1,32], index: 3, kind: output, shape index: {1}]
  %s4 = inlined_call_operand.vmem [shape: f32[2,1,32], index: 4, kind: output, shape index: {2}]
  %5 = xla_tuple %s2, %s3, %s4
  %s6 = sld [smem:[#allocation0]]
  $region57: #{image2tokens_forward.2} parent=0
    _
  %s8 = ssub.s32 1, %s6
  %s9 = scalar_select 0, %s8, %s6
  loop: start=0, step=1, limit=4
  $region2: #{image2tokens_forward.2} parent=0 // loop_pre_header
    _
  $region3: #{image2tokens_forward.2} parent=0 // loop_header
    %s11 = sphi 0, %s15
    %p12 = scmp.ge.s32.totalorder %s11, 4
    %s21 = sphi 0, %s23
    %s24 = sphi 0, %s21
    %s25 = sphi 0, %s24
    %s41 = sphi 0, %s25
    %s45 = sphi 0, %s45
    %s47 = sphi 0, %s45
    %s48 = sphi 0, %s47
    %s62 = sphi 0, %s48
    %s68 = sphi 0, %s70
    %s71 = sphi 0, %s68
    %s72 = sphi 0, %s71
    %s88 = sphi 0, %s72
    %s94 = sphi 0, %s96
    %s97 = sphi 0, %s94
    %s98 = sphi 0, %s97
    %s114 = sphi 0, %s98
    %s120 = sphi 0, %s122
    %s123 = sphi 0, %s120
    %s124 = sphi 0, %s123
    %s140 = sphi 0, %s124
  $region4: #{image2tokens_forward.2} parent=0 // loop_header_branch
    %14 = sbr.rel (%p12) target = $region8
  $region5: #{image2tokens_forward.2} parent=0 // loop_body
    %s16 = ssub.s32 %s11, 1
    %s17 = ssub.s32 %s11, 2
    %s18 = sadd.s32 %s11, 1
    %s19 = ssub.s32 %s11, %s18
    %p20 = scmp.eq.s32.totalorder %s19, 0
    %s22 = sadd.s32 %s21, 1
    %s23 = scalar_select %p20, %s21, %s22
    %p26 = pneg %p20
    %p27 = scmp.eq.s32.totalorder %s11, 1
    %p28 = por %p26, %p27
    %p29 = scmp.ne.s32.totalorder %s21, %s24
    %p30 = scmp.eq.s32.totalorder %s11, 0
    %p31 = por %p29, %p30
    %p32 = scmp.ne.s32.totalorder %s21, %s24
    %p33 = scmp.eq.s32.totalorder %s16, 1
    %p34 = por %p32, %p33
    %p35 = scmp.ne.s32.totalorder %s24, %s25
    %p36 = scmp.eq.s32.totalorder %s16, 0
    %p37 = por %p35, %p36
    %p38 = scmp.ne.s32.totalorder %s24, %s25
    %p39 = scmp.eq.s32.totalorder %s17, 1
    %p40 = por %p38, %p39
    %p42 = scmp.ne.s32.totalorder %s25, %s41
    %p43 = scmp.eq.s32.totalorder %s17, 0
    %p44 = por %p42, %p43
    %s46 = sadd.s32 %s45, 1
    %p49 = scmp.eq.s32.totalorder %s11, 1
    %p50 = scmp.ne.s32.totalorder %s45, %s47
    %p51 = scmp.eq.s32.totalorder %s11, 0
    %p52 = por %p50, %p51
    %p53 = scmp.ne.s32.totalorder %s45, %s47
    %p54 = scmp.eq.s32.totalorder %s16, 1
    %p55 = por %p53, %p54
    %p56 = scmp.ne.s32.totalorder %s47, %s48
    %p57 = scmp.eq.s32.totalorder %s16, 0
    %p58 = por %p56, %p57
    %p59 = scmp.ne.s32.totalorder %s47, %s48
    %p60 = scmp.eq.s32.totalorder %s17, 1
    %p61 = por %p59, %p60
    %p63 = scmp.ne.s32.totalorder %s48, %s62
    %p64 = scmp.eq.s32.totalorder %s17, 0
    %p65 = por %p63, %p64
    %s66 = ssub.s32 %s11, %s18
    %p67 = scmp.eq.s32.totalorder %s66, 0
    %s69 = sadd.s32 %s68, 1
    %s70 = scalar_select %p67, %s68, %s69
    %p73 = pneg %p67
    %p74 = scmp.eq.s32.totalorder %s11, 1
    %p75 = por %p73, %p74
    %p76 = scmp.ne.s32.totalorder %s68, %s71
    %p77 = scmp.eq.s32.totalorder %s11, 0
    %p78 = por %p76, %p77
    %p79 = scmp.ne.s32.totalorder %s68, %s71
    %p80 = scmp.eq.s32.totalorder %s16, 1
    %p81 = por %p79, %p80
    %p82 = scmp.ne.s32.totalorder %s71, %s72
    %p83 = scmp.eq.s32.totalorder %s16, 0
    %p84 = por %p82, %p83
    %p85 = scmp.ne.s32.totalorder %s71, %s72
    %p86 = scmp.eq.s32.totalorder %s17, 1
    %p87 = por %p85, %p86
    %p89 = scmp.ne.s32.totalorder %s72, %s88
    %p90 = scmp.eq.s32.totalorder %s17, 0
    %p91 = por %p89, %p90
    %s92 = ssub.s32 %s11, %s18
    %p93 = scmp.eq.s32.totalorder %s92, 0
    %s95 = sadd.s32 %s94, 1
    %s96 = scalar_select %p93, %s94, %s95
    %p99 = pneg %p93
    %p100 = scmp.eq.s32.totalorder %s11, 1
    %p101 = por %p99, %p100
    %p102 = scmp.ne.s32.totalorder %s94, %s97
    %p103 = scmp.eq.s32.totalorder %s11, 0
    %p104 = por %p102, %p103
    %p105 = scmp.ne.s32.totalorder %s94, %s97
    %p106 = scmp.eq.s32.totalorder %s16, 1
    %p107 = por %p105, %p106
    %p108 = scmp.ne.s32.totalorder %s97, %s98
    %p109 = scmp.eq.s32.totalorder %s16, 0
    %p110 = por %p108, %p109
    %p111 = scmp.ne.s32.totalorder %s97, %s98
    %p112 = scmp.eq.s32.totalorder %s17, 1
    %p113 = por %p111, %p112
    %p115 = scmp.ne.s32.totalorder %s98, %s114
    %p116 = scmp.eq.s32.totalorder %s17, 0
    %p117 = por %p115, %p116
    %s118 = ssub.s32 %s11, %s18
    %p119 = scmp.eq.s32.totalorder %s118, 0
    %s121 = sadd.s32 %s120, 1
    %s122 = scalar_select %p119, %s120, %s121
    %p125 = pneg %p119
    %p126 = scmp.eq.s32.totalorder %s11, 1
    %p127 = por %p125, %p126
    %p128 = scmp.ne.s32.totalorder %s120, %s123
    %p129 = scmp.eq.s32.totalorder %s11, 0
    %p130 = por %p128, %p129
    %p131 = scmp.ne.s32.totalorder %s120, %s123
    %p132 = scmp.eq.s32.totalorder %s16, 1
    %p133 = por %p131, %p132
    %p134 = scmp.ne.s32.totalorder %s123, %s124
    %p135 = scmp.eq.s32.totalorder %s16, 0
    %p136 = por %p134, %p135
    %p137 = scmp.ne.s32.totalorder %s123, %s124
    %p138 = scmp.eq.s32.totalorder %s17, 1
    %p139 = por %p137, %p138
    %p141 = scmp.ne.s32.totalorder %s124, %s140
    %p142 = scmp.eq.s32.totalorder %s17, 0
    %p143 = por %p141, %p142
    %p144 = scmp.le.s32.totalorder 1, %s11
    %p145 = scmp.lt.s32.totalorder %s11, 3
    %p146 = pnand %p144, %p145
    %p147 = pneg %p146
    // Predicated region
    $region9: #{image2tokens_forward.2} parent=5 // pred_check
      _
    $region10: #{image2tokens_forward.2} parent=5 // pred_check_branch
      %149 = sbr.rel (%p146) target = $region12
    $region11: #{image2tokens_forward.2} parent=5 // pred_region
      %s150 = ssub.s32 %s11, 1
      // Predicated region
      $region13: #{image2tokens_forward.2} parent=11 // pred_check
        %p151 = pneg %p58
      $region14: #{image2tokens_forward.2} parent=11 // pred_check_branch
        %153 = sbr.rel (%p151) target = $region16
      $region15: #{image2tokens_forward.2} parent=11 // pred_region
        _
      $region16: #{image2tokens_forward.2} parent=11 // pred_fallthru
        _
    $region12: #{image2tokens_forward.2} parent=5 // pred_fallthru
      _
    %p154 = scmp.lt.s32.totalorder %s11, 2
    // Predicated region
    $region17: #{image2tokens_forward.2} parent=5 // pred_check
      %p155 = pneg %p154
    $region18: #{image2tokens_forward.2} parent=5 // pred_check_branch
      %157 = sbr.rel (%p155) target = $region20
    $region19: #{image2tokens_forward.2} parent=5 // pred_region
      // Predicated region
      $region21: #{image2tokens_forward.2} parent=19 // pred_check
        %p158 = pneg %p31
      $region22: #{image2tokens_forward.2} parent=19 // pred_check_branch
        %160 = sbr.rel (%p158) target = $region24
      $region23: #{image2tokens_forward.2} parent=19 // pred_region
        %s161 = smul.u32 8, %s11
        %p162 = scmp.lt.s32.totalorder %s161, 15
        %s163 = scalar_select %p162, %s161, 15
        %s164 = smul.addr %s163, 2
        %s165 = smul.addr %s164, 4
        %s166 = scalar_lea.vmem %s0, %s165
        %s167 = smul.u32 8, %s11
      $region24: #{image2tokens_forward.2} parent=19 // pred_fallthru
        _
    $region20: #{image2tokens_forward.2} parent=5 // pred_fallthru
      _
    %p168 = scmp.le.s32.totalorder 1, %s11
    %p169 = scmp.lt.s32.totalorder %s11, 3
    %p170 = pnand %p168, %p169
    %p171 = pneg %p170
    // Predicated region
    $region25: #{image2tokens_forward.2} parent=5 // pred_check
      _
    $region26: #{image2tokens_forward.2} parent=5 // pred_check_branch
      %173 = sbr.rel (%p170) target = $region28
    $region27: #{image2tokens_forward.2} parent=5 // pred_region
      %s174 = ssub.s32 %s11, 1
      %s175 = smul.u32 8, %s16
      %p176 = scmp.lt.s32.totalorder %s175, 15
      %s177 = scalar_select %p176, %s175, 15
      %s178 = smul.addr %s177, 2
      %s179 = smul.addr %s178, 4
      %s180 = scalar_lea.vmem %s0, %s179
      %p181 = pneg %p37
      %p182 = pneg %p34
      %p183 = pneg %p58
      %p184 = pneg %p55
      %p185 = pneg %p84
      %p186 = pneg %p81
      %s187 = smul.u32 8, %s16
      %p188 = scmp.lt.s32.totalorder %s187, 15
      %s189 = scalar_select %p188, %s187, 15
      %s190 = smul.addr %s189, 4
      %s191 = scalar_lea.vmem %s2, %s190
      %p192 = pneg %p110
      %p193 = pneg %p107
      %p194 = scmp.lt.s32.totalorder %s16, 1
      %s195 = scalar_select %p194, %s16, 1
      %s196 = scalar_lea.vmem %s3, %s195
      %p197 = pneg %p136
      %p198 = pneg %p133
      %p199 = scmp.lt.s32.totalorder %s16, 1
      %s200 = scalar_select %p199, %s16, 1
      %s201 = scalar_lea.vmem %s4, %s200
      %s202 = smul.u32 8, %s16
      %p203 = scmp.lt.s32.totalorder %s202, 15
      %s204 = scalar_select %p203, %s202, 15
      %s205 = smul.addr %s204, 2
      %s206 = smul.addr %s205, 4
      %s207 = scalar_lea.vmem %s0, %s206
      %s208 = smul.u32 8, %s16
      %s209 = smul.u32 8, %s16
      %p210 = scmp.lt.s32.totalorder %s209, 15
      %s211 = scalar_select %p210, %s209, 15
      %s212 = smul.addr %s211, 4
      %s213 = scalar_lea.vmem %s2, %s212
      %s214 = smul.u32 8, %s16
      %p215 = scmp.lt.s32.totalorder %s16, 1
      %s216 = scalar_select %p215, %s16, 1
      %s217 = scalar_lea.vmem %s3, %s216
      %p218 = scmp.lt.s32.totalorder %s16, 1
      %s219 = scalar_select %p218, %s16, 1
      %s220 = scalar_lea.vmem %s4, %s219
      %v222 = vld [vmem:[%s207] sm:$0xff]
      %v223 = vld [vmem:[%s207 + $0x8] sm:$0xff]
      %v224 = vld [vmem:[%s207 + $0x10] sm:$0xff]
      %v225 = vld [vmem:[%s207 + $0x18] sm:$0xff]
      %v226 = vld [vmem:[%s207 + $0x20] sm:$0xff]
      %v227 = vld [vmem:[%s207 + $0x28] sm:$0xff]
      %v228 = vld [vmem:[%s207 + $0x30] sm:$0xff]
      %v229 = vld [vmem:[%s207 + $0x38] sm:$0xff]
      %v230 = vld [vmem:[%s1] sm:$0xf]
      %v231 = vld [vmem:[%s1 + $0x4] sm:$0xf]
      %v232 = vld [vmem:[%s1 + $0x8] sm:$0xf]
      %v233 = vld [vmem:[%s1 + $0xc] sm:$0xf]
      %v234 = vld [vmem:[%s1 + $0x10] sm:$0xf]
      %v235 = vld [vmem:[%s1 + $0x14] sm:$0xf]
      %v236 = vld [vmem:[%s1 + $0x18] sm:$0xf]
      %v237 = vld [vmem:[%s1 + $0x1c] sm:$0xf]
      %v238 = vld [vmem:[%s1 + $0x20] sm:$0xf]
      %v239 = vld [vmem:[%s1 + $0x24] sm:$0xf]
      %v240 = vld [vmem:[%s1 + $0x28] sm:$0xf]
      %v241 = vld [vmem:[%s1 + $0x2c] sm:$0xf]
      %v242 = vld [vmem:[%s1 + $0x30] sm:$0xf]
      %v243 = vld [vmem:[%s1 + $0x34] sm:$0xf]
      %v244 = vld [vmem:[%s1 + $0x38] sm:$0xf]
      %v245 = vld [vmem:[%s1 + $0x3c] sm:$0xf]
      %v246 = vld [vmem:[%s1 + $0x40] sm:$0xf]
      %v247 = vld [vmem:[%s1 + $0x44] sm:$0xf]
      %v248 = vld [vmem:[%s1 + $0x48] sm:$0xf]
      %v249 = vld [vmem:[%s1 + $0x4c] sm:$0xf]
      %v250 = vld [vmem:[%s1 + $0x50] sm:$0xf]
      %v251 = vld [vmem:[%s1 + $0x54] sm:$0xf]
      %v252 = vld [vmem:[%s1 + $0x58] sm:$0xf]
      %v253 = vld [vmem:[%s1 + $0x5c] sm:$0xf]
      %v254 = vld [vmem:[%s1 + $0x60] sm:$0x3]
      %v263 = vunpack.c.l.b16 %v222
      %v264 = vunpack.c.h.b16 %v222
      %v265 = vunpack.c.l.b16 %v223
      %v266 = vunpack.c.h.b16 %v223
      %v267 = vunpack.c.l.b16 %v224
      %v268 = vunpack.c.h.b16 %v224
      %v269 = vunpack.c.l.b16 %v225
      %v270 = vunpack.c.h.b16 %v225
      %v271 = vunpack.c.l.b16 %v226
      %v272 = vunpack.c.h.b16 %v226
      %v273 = vunpack.c.l.b16 %v227
      %v274 = vunpack.c.h.b16 %v227
      %v275 = vunpack.c.l.b16 %v228
      %v276 = vunpack.c.h.b16 %v228
      %v277 = vunpack.c.l.b16 %v229
      %v278 = vunpack.c.h.b16 %v229
      %v279 = vpack.c.b16 %v265, %v263
      %v280 = vpack.c.b16 %v266, %v264
      %v281 = vpack.c.b16 %v269, %v267
      %v282 = vpack.c.b16 %v270, %v268
      %v283 = vpack.c.b16 %v273, %v271
      %v284 = vpack.c.b16 %v274, %v272
      %v285 = vpack.c.b16 %v277, %v275
      %v286 = vpack.c.b16 %v278, %v276
      %v316 = vunpack.c.l.b16 %v230
      %v317 = vunpack.c.l.b16 %v231
      %v318 = vunpack.c.l.b16 %v232
      %v319 = vunpack.c.l.b16 %v233
      %v320 = vunpack.c.l.b16 %v234
      %v321 = vunpack.c.l.b16 %v235
      %v322 = vunpack.c.l.b16 %v236
      %v323 = vunpack.c.l.b16 %v237
      %v324 = vunpack.c.l.b16 %v238
      %v325 = vunpack.c.l.b16 %v239
      %v326 = vunpack.c.l.b16 %v240
      %v327 = vunpack.c.l.b16 %v241
      %v328 = vunpack.c.l.b16 %v242
      %v329 = vunpack.c.l.b16 %v243
      %v330 = vunpack.c.l.b16 %v244
      %v331 = vunpack.c.l.b16 %v245
      %v332 = vunpack.c.l.b16 %v246
      %v333 = vunpack.c.l.b16 %v247
      %v334 = vunpack.c.l.b16 %v248
      %v335 = vunpack.c.l.b16 %v249
      %v336 = vunpack.c.l.b16 %v250
      %v337 = vunpack.c.l.b16 %v251
      %v338 = vunpack.c.l.b16 %v252
      %v339 = vunpack.c.l.b16 %v253
      %v340 = vunpack.c.l.b16 %v254
      %v341 = vpack.c.b16 %v317, %v316
      %v342 = vpack.c.b16 %v319, %v318
      %v343 = vpack.c.b16 %v321, %v320
      %v344 = vpack.c.b16 %v323, %v322
      %v345 = vpack.c.b16 %v325, %v324
      %v346 = vpack.c.b16 %v327, %v326
      %v347 = vpack.c.b16 %v329, %v328
      %v348 = vpack.c.b16 %v331, %v330
      %v349 = vpack.c.b16 %v333, %v332
      %v350 = vpack.c.b16 %v335, %v334
      %v351 = vpack.c.b16 %v337, %v336
      %v352 = vpack.c.b16 %v339, %v338
      %v353 = vpack.c.b16 %v340, %v340
      %vm366 = vcmask 556032
      %v368 = vsel %vm366, %v280, 0
      %v371 = vsel %vm366, %v282, 0
      %v374 = vsel %vm366, %v284, 0
      %v377 = vsel %vm366, %v286, 0
      %vm379 = vcmask 1041408
      %v381 = vsel %vm379, %v353, 0
      %383 = vmatprep.subr.bf16.mxu0 0
      %384 = vmatpush1.bf16.msra.mxu0 %v341
      %385 = vmatprep.subr.bf16.mxu0 0
      %386 = vmatpush1.bf16.msra.mxu0 %v342
      %387 = vmatprep.subr.bf16.mxu0 0
      %388 = vmatpush1.bf16.msra.mxu0 %v343
      %389 = vmatprep.subr.bf16.mxu0 0
      %390 = vmatpush1.bf16.msra.mxu0 %v344
      %391 = vmatprep.subr.bf16.mxu0 0
      %392 = vmatpush1.bf16.msra.mxu0 %v345
      %393 = vmatprep.subr.bf16.mxu0 0
      %394 = vmatpush1.bf16.msra.mxu0 %v346
      %395 = vmatprep.subr.bf16.mxu0 0
      %396 = vmatpush1.bf16.msra.mxu0 %v347
      %397 = vmatprep.subr.bf16.mxu0 0
      %398 = vmatpush1.bf16.msra.mxu0 %v348
      %399 = vmatprep.subr.bf16.mxu0 0
      %400 = vmatpush1.bf16.msra.mxu0 %v349
      %401 = vmatprep.subr.bf16.mxu0 0
      %402 = vmatpush1.bf16.msra.mxu0 %v350
      %403 = vmatprep.subr.bf16.mxu0 0
      %404 = vmatpush1.bf16.msra.mxu0 %v351
      %405 = vmatprep.subr.bf16.mxu0 0
      %406 = vmatpush1.bf16.msra.mxu0 %v352
      %407 = vmatprep.subr.bf16.mxu0 0
      %408 = vmatpush1.bf16.msra.mxu0 %v381
      %409 = vmatprep.subr.bf16.mxu0 0
      %410 = vmatpush1.bf16.msra.mxu0 0
      %411 = vmatprep.subr.bf16.mxu0 0
      %412 = vmatpush1.bf16.msra.mxu0 0
      %413 = vmatprep.subr.bf16.mxu0 0
      %414 = vmatpush1.bf16.msra.mxu0 0
      %415 = vmatprep.mubr.bf16.mxu0 %v368
      %416 = vmatmul.mubr.bf16.gmra.mrb[0].mxu0 %v279
      %v417 = vpop.f32.mrb[0].mxu0
      %v418 = vadd.f32 0.0, %v417
      %v419 = vpop.f32.mrb[0].mxu0
      %v420 = vpop.f32.mrb[0].mxu0
      %v421 = vadd.f32 0.0, %v420
      %v422 = vpop.f32.mrb[0].mxu0
      %423 = vmatprep.mubr.bf16.mxu0 %v371
      %424 = vmatmul.mubr.bf16.gmra.mrb[0].mxu0 %v281
      %v425 = vpop.f32.mrb[0].mxu0
      %v426 = vadd.f32 0.0, %v425
      %v427 = vpop.f32.mrb[0].mxu0
      %v428 = vpop.f32.mrb[0].mxu0
      %v429 = vadd.f32 0.0, %v428
      %v430 = vpop.f32.mrb[0].mxu0
      %431 = vmatprep.mubr.bf16.mxu0 %v374
      %432 = vmatmul.mubr.bf16.gmra.mrb[0].mxu0 %v283
      %v433 = vpop.f32.mrb[0].mxu0
      %v434 = vadd.f32 0.0, %v433
      %v435 = vpop.f32.mrb[0].mxu0
      %v436 = vpop.f32.mrb[0].mxu0
      %v437 = vadd.f32 0.0, %v436
      %v438 = vpop.f32.mrb[0].mxu0
      %439 = vmatprep.mubr.bf16.mxu0 %v377
      %440 = vmatmul.mubr.bf16.gmra.mrb[0].mxu0 %v285
      %v441 = vpop.f32.mrb[0].mxu0
      %v442 = vadd.f32 0.0, %v441
      %v443 = vpop.f32.mrb[0].mxu0
      %v444 = vpop.f32.mrb[0].mxu0
      %v445 = vadd.f32 0.0, %v444
      %v446 = vpop.f32.mrb[0].mxu0
      %447 = vdwg.mxu0
      %v448 = vpack.c.bf16 %v421, %v418
      %v449 = vpack.c.bf16 %v429, %v426
      %v450 = vpack.c.bf16 %v437, %v434
      %v451 = vpack.c.bf16 %v445, %v442
      %v456 = vunpack.c.l.b16 %v448
      %v457 = vunpack.c.h.b16 %v448
      %v458 = vunpack.c.l.b16 %v449
      %v459 = vunpack.c.h.b16 %v449
      %v460 = vunpack.c.l.b16 %v450
      %v461 = vunpack.c.h.b16 %v450
      %v462 = vunpack.c.l.b16 %v451
      %v463 = vunpack.c.h.b16 %v451
      %v464 = vpack.c.b16 %v456, %v456
      %v465 = vpack.c.b16 %v457, %v457
      %v466 = vpack.c.b16 %v458, %v458
      %v467 = vpack.c.b16 %v459, %v459
      %v468 = vpack.c.b16 %v460, %v460
      %v469 = vpack.c.b16 %v461, %v461
      %v470 = vpack.c.b16 %v462, %v462
      %v471 = vpack.c.b16 %v463, %v463
      %vm480 = vcmask 257024
      %481 = vst.msk [vmem:[%s213] sm:$0xf] %vm480, %v464
      %482 = vst.msk [vmem:[%s213 + $0x4] sm:$0xf] %vm480, %v465
      %483 = vst.msk [vmem:[%s213 + $0x8] sm:$0xf] %vm480, %v466
      %484 = vst.msk [vmem:[%s213 + $0xc] sm:$0xf] %vm480, %v467
      %485 = vst.msk [vmem:[%s213 + $0x10] sm:$0xf] %vm480, %v468
      %486 = vst.msk [vmem:[%s213 + $0x14] sm:$0xf] %vm480, %v469
      %487 = vst.msk [vmem:[%s213 + $0x18] sm:$0xf] %vm480, %v470
      %488 = vst.msk [vmem:[%s213 + $0x1c] sm:$0xf] %vm480, %v471
      %vm489 = vcmask 261120
      %v490 = vsel %vm489, %v418, 0.0
      %v491 = vsel %vm489, %v421, 0.0
      %v492 = vadd.f32 %v490, %v491
      %v493 = vsel %vm489, %v426, 0.0
      %v494 = vadd.f32 %v492, %v493
      %v495 = vsel %vm489, %v429, 0.0
      %v496 = vadd.f32 %v494, %v495
      %v497 = vsel %vm489, %v434, 0.0
      %v498 = vadd.f32 %v496, %v497
      %v499 = vsel %vm489, %v437, 0.0
      %v500 = vadd.f32 %v498, %v499
      %v501 = vsel %vm489, %v442, 0.0
      %v502 = vadd.f32 %v500, %v501
      %v503 = vsel %vm489, %v445, 0.0
      %v504 = vadd.f32 %v502, %v503
      %v505 = vrot.slane %v504, 4
      %v506 = vadd.f32 %v504, %v505
      %v507 = vrot.slane %v506, 2
      %v508 = vadd.f32 %v506, %v507
      %v509 = vrot.slane %v508, 1
      %v510 = vadd.f32 %v508, %v509
      %vm511 = vcmask 253952
      %512 = vst.msk [vmem:[%s217] sm:$0x1] %vm511, %v510
      %v513 = vmul.f32 %v418, %v418
      %v514 = vmul.f32 %v421, %v421
      %v515 = vmul.f32 %v426, %v426
      %v516 = vmul.f32 %v429, %v429
      %v517 = vmul.f32 %v434, %v434
      %v518 = vmul.f32 %v437, %v437
      %v519 = vmul.f32 %v442, %v442
      %v520 = vmul.f32 %v445, %v445
      %v521 = vsel %vm489, %v513, 0.0
      %v522 = vsel %vm489, %v514, 0.0
      %v523 = vadd.f32 %v521, %v522
      %v524 = vsel %vm489, %v515, 0.0
      %v525 = vadd.f32 %v523, %v524
      %v526 = vsel %vm489, %v516, 0.0
      %v527 = vadd.f32 %v525, %v526
      %v528 = vsel %vm489, %v517, 0.0
      %v529 = vadd.f32 %v527, %v528
      %v530 = vsel %vm489, %v518, 0.0
      %v531 = vadd.f32 %v529, %v530
      %v532 = vsel %vm489, %v519, 0.0
      %v533 = vadd.f32 %v531, %v532
      %v534 = vsel %vm489, %v520, 0.0
      %v535 = vadd.f32 %v533, %v534
      %v536 = vrot.slane %v535, 4
      %v537 = vadd.f32 %v535, %v536
      %v538 = vrot.slane %v537, 2
      %v539 = vadd.f32 %v537, %v538
      %v540 = vrot.slane %v539, 1
      %v541 = vadd.f32 %v539, %v540
      %542 = vst.msk [vmem:[%s220] sm:$0x1] %vm511, %v541
      %s543 = smul.u32 8, %s16
      %p544 = scmp.lt.s32.totalorder %s543, 15
      %s545 = scalar_select %p544, %s543, 15
      %s546 = smul.addr %s545, 4
      %s547 = scalar_lea.vmem %s2, %s546
      %p548 = scmp.lt.s32.totalorder %s16, 1
      %s549 = scalar_select %p548, %s16, 1
      %s550 = scalar_lea.vmem %s3, %s549
      %p551 = scmp.lt.s32.totalorder %s16, 1
      %s552 = scalar_select %p551, %s16, 1
      %s553 = scalar_lea.vmem %s4, %s552
      // Predicated region
      $region29: #{image2tokens_forward.2} parent=27 // pred_check
        %p554 = pneg %p81
      $region30: #{image2tokens_forward.2} parent=27 // pred_check_branch
        %556 = sbr.rel (%p554) target = $region32
      $region31: #{image2tokens_forward.2} parent=27 // pred_region
        %s557 = smul.u32 8, %s16
      $region32: #{image2tokens_forward.2} parent=27 // pred_fallthru
        _
      // Predicated region
      $region33: #{image2tokens_forward.2} parent=27 // pred_check
        %p558 = pneg %p107
      $region34: #{image2tokens_forward.2} parent=27 // pred_check_branch
        %560 = sbr.rel (%p558) target = $region36
      $region35: #{image2tokens_forward.2} parent=27 // pred_region
        _
      $region36: #{image2tokens_forward.2} parent=27 // pred_fallthru
        _
      // Predicated region
      $region37: #{image2tokens_forward.2} parent=27 // pred_check
        %p561 = pneg %p133
      $region38: #{image2tokens_forward.2} parent=27 // pred_check_branch
        %563 = sbr.rel (%p561) target = $region40
      $region39: #{image2tokens_forward.2} parent=27 // pred_region
        _
      $region40: #{image2tokens_forward.2} parent=27 // pred_fallthru
        _
    $region28: #{image2tokens_forward.2} parent=5 // pred_fallthru
      _
    %p564 = scmp.le.s32.totalorder 2, %s11
    // Predicated region
    $region41: #{image2tokens_forward.2} parent=5 // pred_check
      %p565 = pneg %p564
    $region42: #{image2tokens_forward.2} parent=5 // pred_check_branch
      %567 = sbr.rel (%p565) target = $region44
    $region43: #{image2tokens_forward.2} parent=5 // pred_region
      %s568 = ssub.s32 %s11, 2
      // Predicated region
      $region45: #{image2tokens_forward.2} parent=43 // pred_check
        %p569 = pneg %p87
      $region46: #{image2tokens_forward.2} parent=43 // pred_check_branch
        %571 = sbr.rel (%p569) target = $region48
      $region47: #{image2tokens_forward.2} parent=43 // pred_region
        %s572 = smul.u32 8, %s17
        %p573 = scmp.lt.s32.totalorder %s572, 15
        %s574 = scalar_select %p573, %s572, 15
        %s575 = smul.addr %s574, 4
        %s576 = scalar_lea.vmem %s2, %s575
      $region48: #{image2tokens_forward.2} parent=43 // pred_fallthru
        _
      // Predicated region
      $region49: #{image2tokens_forward.2} parent=43 // pred_check
        %p577 = pneg %p113
      $region50: #{image2tokens_forward.2} parent=43 // pred_check_branch
        %579 = sbr.rel (%p577) target = $region52
      $region51: #{image2tokens_forward.2} parent=43 // pred_region
        %p580 = scmp.lt.s32.totalorder %s17, 1
        %s581 = scalar_select %p580, %s17, 1
        %s582 = scalar_lea.vmem %s3, %s581
      $region52: #{image2tokens_forward.2} parent=43 // pred_fallthru
        _
      // Predicated region
      $region53: #{image2tokens_forward.2} parent=43 // pred_check
        %p583 = pneg %p139
      $region54: #{image2tokens_forward.2} parent=43 // pred_check_branch
        %585 = sbr.rel (%p583) target = $region56
      $region55: #{image2tokens_forward.2} parent=43 // pred_region
        %p586 = scmp.lt.s32.totalorder %s17, 1
        %s587 = scalar_select %p586, %s17, 1
        %s588 = scalar_lea.vmem %s4, %s587
      $region56: #{image2tokens_forward.2} parent=43 // pred_fallthru
        _
    $region44: #{image2tokens_forward.2} parent=5 // pred_fallthru
      _
  $region6: #{image2tokens_forward.2} parent=0 // loop_footer
    %s15 = sadd.s32 1, %s11
  $region7: #{image2tokens_forward.2} parent=0 // loop_footer_branch
    %10 = sbr.rel target = $region3
  $region8: #{image2tokens_forward.2} parent=0 // loop_exit
    _

</llo_original>
